<compile_context>
chip_gen: v7x
topology: tpu7x:2x2x1
jax: 0.10.0
libtpu: 0.0.40
codegen_flags: <defaults>
</compile_context>

<pallas_src>
import functools

import jax
import jax.numpy as jnp
from jax.experimental import pallas as pl
from jax.experimental.pallas import tpu as pltpu


def mha_kernel(q_ref, k_ref, v_ref,
               wq_ref, wk_ref, wv_ref, wfc_ref,
               gamma_ref, beta_ref,
               out_ref, attn_ref,
               acc_ref,
               *, eps):
    h = pl.program_id(2)
    n_head = pl.num_programs(2)
    bf16 = jnp.bfloat16

    q_b = q_ref[0]                                   # (Tq, d_model) f32 (residual)
    q_bf = q_b.astype(bf16)
    k_bf = k_ref[0].astype(bf16)                     # (Lk, d_model)
    v_bf = v_ref[0].astype(bf16)

    # Per-head projections: full-width (d_model) contraction, bf16 in, f32 acc.
    # The 1/sqrt(d_k) softmax scale is already folded into w_q by the wrapper.
    Qh = jnp.dot(q_bf, wq_ref[0], preferred_element_type=jnp.float32)   # (Tq, d_k)
    Kh = jnp.dot(k_bf, wk_ref[0], preferred_element_type=jnp.float32)   # (Lk, d_k)
    Vh = jnp.dot(v_bf, wv_ref[0], preferred_element_type=jnp.float32)   # (Lk, d_v)

    # Scores: (Tq, Lk) = Qh @ Kh^T via dot_general (no explicit transpose op).
    s = jax.lax.dot_general(
        Qh.astype(bf16), Kh.astype(bf16),
        dimension_numbers=(((1,), (1,)), ((), ())),
        preferred_element_type=jnp.float32)

    # Numerically-stable softmax over keys; reciprocal on the EUP slot.
    m = jnp.max(s, axis=-1, keepdims=True)
    e = jnp.exp(s - m)
    p = e * pl.reciprocal(jnp.sum(e, axis=-1, keepdims=True), approx=True)

    # Single store of this head's probability tile.
    attn_ref[0, 0] = p.astype(attn_ref.dtype)

    # Per-head context and its contribution to the output projection,
    # accumulated into a VMEM scratch (replaces concatenate + big fc matmul).
    Oh = jnp.dot(p.astype(bf16), Vh.astype(bf16),
                 preferred_element_type=jnp.float32)                    # (Tq, d_v)
    contrib = jnp.dot(Oh.astype(bf16), wfc_ref[0],
                      preferred_element_type=jnp.float32)               # (Tq, d_model)

    @pl.when(h == 0)
    def _():
        acc_ref[...] = jnp.zeros_like(acc_ref)

    acc_ref[...] += contrib

    # Last head: dropout (eval => identity), residual add, LayerNorm(eps=1e-6).
    @pl.when(h == n_head - 1)
    def _():
        x = acc_ref[...] + q_b
        mean = jnp.mean(x, axis=-1, keepdims=True)
        var = jnp.mean((x - mean) ** 2, axis=-1, keepdims=True)
        x_hat = (x - mean) * jax.lax.rsqrt(var + eps)
        out_ref[0] = (x_hat * gamma_ref[...] + beta_ref[...]).astype(out_ref.dtype)


def multi_head_attention(q, k, v, params, *, n_head, d_k, d_v,
                         block_q=256, attn_dtype=jnp.float32):
    B, Lq, d_model = q.shape
    Lk = k.shape[1]

    block_q = min(block_q, Lq)
    assert Lq % block_q == 0, "Lq must be divisible by block_q"
    num_q_tiles = Lq // block_q

    bf16 = jnp.bfloat16
    scale_inv = 1.0 / (d_k ** 0.5)
    # Per-head weight slabs, pre-cast to bf16.  Softmax scale folded into w_q.
    wq = (params["w_q"] * scale_inv).reshape(d_model, n_head, d_k) \
                                    .transpose(1, 0, 2).astype(bf16)      # (H, d_model, d_k)
    wk = params["w_k"].reshape(d_model, n_head, d_k).transpose(1, 0, 2).astype(bf16)
    wv = params["w_v"].reshape(d_model, n_head, d_v).transpose(1, 0, 2).astype(bf16)
    wfc = params["fc"].reshape(n_head, d_v, d_model).astype(bf16)         # (H, d_v, d_model)
    gamma, beta = params["ln_gamma"], params["ln_beta"]

    kernel = functools.partial(mha_kernel, eps=1e-6)

    # Advisory cost estimate for the XLA scheduler.
    flops = 2 * B * (
        Lq * d_model * n_head * d_k                              # Q projection
        + num_q_tiles * Lk * d_model * n_head * (d_k + d_v)      # K/V projections
        + n_head * Lq * Lk * (d_k + d_v)                         # QK^T and PV
        + Lq * n_head * d_v * d_model                            # output projection
    )
    transcendentals = B * n_head * Lq * Lk
    bytes_accessed = (
        4 * B * Lq * d_model                                     # q
        + 2 * 4 * B * Lk * d_model                               # k, v
        + 2 * (2 * d_model * n_head * d_k + d_model * n_head * d_v
               + n_head * d_v * d_model)                         # bf16 weights
        + 4 * B * Lq * d_model                                   # out
        + jnp.dtype(attn_dtype).itemsize * B * n_head * Lq * Lk  # attn
    )
    ce = pl.CostEstimate(flops=flops, transcendentals=transcendentals,
                         bytes_accessed=bytes_accessed)

    out, attn = pl.pallas_call(
        kernel,
        out_shape=(
            jax.ShapeDtypeStruct((B, Lq, d_model), jnp.float32),
            jax.ShapeDtypeStruct((B, n_head, Lq, Lk), attn_dtype),
        ),
        grid_spec=pltpu.PrefetchScalarGridSpec(
            num_scalar_prefetch=0,
            grid=(B, num_q_tiles, n_head),
            in_specs=[
                pl.BlockSpec((1, block_q, d_model), lambda b, qi, h: (b, qi, 0)),   # q
                pl.BlockSpec((1, Lk, d_model),      lambda b, qi, h: (b, 0, 0)),    # k
                pl.BlockSpec((1, Lk, d_model),      lambda b, qi, h: (b, 0, 0)),    # v
                pl.BlockSpec((1, d_model, d_k),     lambda b, qi, h: (h, 0, 0)),    # w_q[h]
                pl.BlockSpec((1, d_model, d_k),     lambda b, qi, h: (h, 0, 0)),    # w_k[h]
                pl.BlockSpec((1, d_model, d_v),     lambda b, qi, h: (h, 0, 0)),    # w_v[h]
                pl.BlockSpec((1, d_v, d_model),     lambda b, qi, h: (h, 0, 0)),    # fc[h]
                pl.BlockSpec((1, d_model),          lambda b, qi, h: (0, 0)),       # gamma
                pl.BlockSpec((1, d_model),          lambda b, qi, h: (0, 0)),       # beta
            ],
            out_specs=[
                pl.BlockSpec((1, block_q, d_model), lambda b, qi, h: (b, qi, 0)),
                pl.BlockSpec((1, 1, block_q, Lk),   lambda b, qi, h: (b, h, qi, 0)),
            ],
            scratch_shapes=[pltpu.VMEM((block_q, d_model), jnp.float32)],
        ),
        compiler_params=pltpu.CompilerParams(
            dimension_semantics=("parallel", "parallel", "arbitrary"),
            vmem_limit_bytes=48 * 1024 * 1024,
        ),
        cost_estimate=ce,
    )(q, k, v, wq, wk, wv, wfc, gamma, beta)
    return out, attn


def init_params(key, n_head, d_model, d_k, d_v):
    k1, k2, k3, k4 = jax.random.split(key, 4)
    scale = 0.05
    return {
        # stored (in_features, out_features) — kernel computes x @ W
        "w_q": scale * jax.random.normal(k1, (d_model, n_head * d_k), jnp.float32),
        "w_k": scale * jax.random.normal(k2, (d_model, n_head * d_k), jnp.float32),
        "w_v": scale * jax.random.normal(k3, (d_model, n_head * d_v), jnp.float32),
        "fc":  scale * jax.random.normal(k4, (n_head * d_v, d_model), jnp.float32),
        "ln_gamma": jnp.ones((1, d_model), jnp.float32),
        "ln_beta":  jnp.zeros((1, d_model), jnp.float32),
    }


def reference(q, k, v, params, *, n_head, d_k, d_v):
    """Pure-JAX f32 reference of the PyTorch forward (eval mode, no mask)."""
    B, Lq, d_model = q.shape
    Lk = k.shape[1]
    residual = q
    Q = (q @ params["w_q"]).reshape(B, Lq, n_head, d_k).transpose(0, 2, 1, 3)
    K = (k @ params["w_k"]).reshape(B, Lk, n_head, d_k).transpose(0, 2, 1, 3)
    V = (v @ params["w_v"]).reshape(B, Lk, n_head, d_v).transpose(0, 2, 1, 3)
    s = jnp.einsum("bhqd,bhkd->bhqk", Q, K) / (d_k ** 0.5)
    attn = jax.nn.softmax(s, axis=-1)
    o = jnp.einsum("bhqk,bhkd->bhqd", attn, V)
    o = o.transpose(0, 2, 1, 3).reshape(B, Lq, n_head * d_v)
    o = o @ params["fc"] + residual
    mean = o.mean(-1, keepdims=True)
    var = ((o - mean) ** 2).mean(-1, keepdims=True)
    o = (o - mean) / jnp.sqrt(var + 1e-6)
    o = o * params["ln_gamma"][0] + params["ln_beta"][0]
    return o, attn


if __name__ == "__main__":
    # Small shapes consistent with the module's forward.
    B, L, d_model = 2, 8, 32
    n_head, d_k, d_v = 4, 8, 8

    key = jax.random.PRNGKey(0)
    kq, kk, kv, kp = jax.random.split(key, 4)
    q = jax.random.normal(kq, (B, L, d_model), jnp.float32)
    k = jax.random.normal(kk, (B, L, d_model), jnp.float32)
    v = jax.random.normal(kv, (B, L, d_model), jnp.float32)
    params = init_params(kp, n_head, d_model, d_k, d_v)

    out, attn = multi_head_attention(q, k, v, params,
                                     n_head=n_head, d_k=d_k, d_v=d_v)
    jax.block_until_ready((out, attn))

    out_ref, attn_ref = reference(q, k, v, params,
                                  n_head=n_head, d_k=d_k, d_v=d_v)
    # bf16 MXU inputs + approx reciprocal => slightly looser tolerances.
    assert jnp.allclose(out, out_ref, atol=1e-2, rtol=1e-2), "output mismatch"
    assert jnp.allclose(attn, attn_ref, atol=1e-2, rtol=1e-2), "attn mismatch"

    print("KERNEL_OK")
</pallas_src>

<mosaic_0001>
module attributes {stable_mosaic.version = 11 : i64} {
  func.func @mha_kernel(%arg0: i32, %arg1: i32, %arg2: i32, %arg3: memref<1x8x32xf32, #tpu.memory_space<vmem>>, %arg4: memref<1x8x32xf32, #tpu.memory_space<vmem>>, %arg5: memref<1x8x32xf32, #tpu.memory_space<vmem>>, %arg6: memref<1x32x8xbf16, #tpu.memory_space<vmem>>, %arg7: memref<1x32x8xbf16, #tpu.memory_space<vmem>>, %arg8: memref<1x32x8xbf16, #tpu.memory_space<vmem>>, %arg9: memref<1x8x32xbf16, #tpu.memory_space<vmem>>, %arg10: memref<1x32xf32, #tpu.memory_space<vmem>>, %arg11: memref<1x32xf32, #tpu.memory_space<vmem>>, %arg12: memref<1x8x32xf32, #tpu.memory_space<vmem>>, %arg13: memref<1x1x8x8xf32, #tpu.memory_space<vmem>>, %arg14: memref<8x32xf32, #tpu.memory_space<vmem>>) attributes {dimension_semantics = [#tpu.dimension_semantics<parallel>, #tpu.dimension_semantics<parallel>, #tpu.dimension_semantics<arbitrary>], iteration_bounds = array<i64: 2, 1, 4>, scalar_prefetch = 0 : i64, scratch_operands = 1 : i64, tpu.core_type = #tpu.core_type<tc>, window_params = [{transform_indices = @transform_0, window_bounds = array<i64: 1, 8, 32>}, {transform_indices = @transform_1, window_bounds = array<i64: 1, 8, 32>}, {transform_indices = @transform_2, window_bounds = array<i64: 1, 8, 32>}, {transform_indices = @transform_3, window_bounds = array<i64: 1, 32, 8>}, {transform_indices = @transform_4, window_bounds = array<i64: 1, 32, 8>}, {transform_indices = @transform_5, window_bounds = array<i64: 1, 32, 8>}, {transform_indices = @transform_6, window_bounds = array<i64: 1, 8, 32>}, {pipeline_mode = #tpu.pipeline_mode<synchronous>, transform_indices = @transform_7, window_bounds = array<i64: 1, 32>}, {pipeline_mode = #tpu.pipeline_mode<synchronous>, transform_indices = @transform_8, window_bounds = array<i64: 1, 32>}, {transform_indices = @transform_9, window_bounds = array<i64: 1, 8, 32>}, {transform_indices = @transform_10, window_bounds = array<i64: 1, 1, 8, 8>}]} {
    %c0 = arith.constant 0 : index
    %c0_0 = arith.constant 0 : index
    %c0_1 = arith.constant 0 : index
    %0 = vector.load %arg3[%c0, %c0_0, %c0_1] : memref<1x8x32xf32, #tpu.memory_space<vmem>>, vector<1x8x32xf32>
    %1 = vector.shape_cast %0 : vector<1x8x32xf32> to vector<8x32xf32>
    %2 = arith.truncf %1 : vector<8x32xf32> to vector<8x32xbf16>
    %c0_2 = arith.constant 0 : index
    %c0_3 = arith.constant 0 : index
    %c0_4 = arith.constant 0 : index
    %3 = vector.load %arg4[%c0_2, %c0_3, %c0_4] : memref<1x8x32xf32, #tpu.memory_space<vmem>>, vector<1x8x32xf32>
    %4 = vector.shape_cast %3 : vector<1x8x32xf32> to vector<8x32xf32>
    %5 = arith.truncf %4 : vector<8x32xf32> to vector<8x32xbf16>
    %c0_5 = arith.constant 0 : index
    %c0_6 = arith.constant 0 : index
    %c0_7 = arith.constant 0 : index
    %6 = vector.load %arg5[%c0_5, %c0_6, %c0_7] : memref<1x8x32xf32, #tpu.memory_space<vmem>>, vector<1x8x32xf32>
    %7 = vector.shape_cast %6 : vector<1x8x32xf32> to vector<8x32xf32>
    %8 = arith.truncf %7 : vector<8x32xf32> to vector<8x32xbf16>
    %c0_8 = arith.constant 0 : index
    %c0_9 = arith.constant 0 : index
    %c0_10 = arith.constant 0 : index
    %9 = vector.load %arg6[%c0_8, %c0_9, %c0_10] : memref<1x32x8xbf16, #tpu.memory_space<vmem>>, vector<1x32x8xbf16>
    %10 = vector.shape_cast %9 : vector<1x32x8xbf16> to vector<32x8xbf16>
    %cst = arith.constant dense<0.000000e+00> : vector<8x8xf32>
    %11 = tpu.matmul %2, %10, %cst {dimension_numbers = #tpu.dot_dimension_numbers<[1], [0], [0], [1], [0, 0, 1, 1], [], []>} : vector<8x32xbf16>, vector<32x8xbf16>, vector<8x8xf32> -> vector<8x8xf32>
    %c0_11 = arith.constant 0 : index
    %c0_12 = arith.constant 0 : index
    %c0_13 = arith.constant 0 : index
    %12 = vector.load %arg7[%c0_11, %c0_12, %c0_13] : memref<1x32x8xbf16, #tpu.memory_space<vmem>>, vector<1x32x8xbf16>
    %13 = vector.shape_cast %12 : vector<1x32x8xbf16> to vector<32x8xbf16>
    %cst_14 = arith.constant dense<0.000000e+00> : vector<8x8xf32>
    %14 = tpu.matmul %5, %13, %cst_14 {dimension_numbers = #tpu.dot_dimension_numbers<[1], [0], [0], [1], [0, 0, 1, 1], [], []>} : vector<8x32xbf16>, vector<32x8xbf16>, vector<8x8xf32> -> vector<8x8xf32>
    %c0_15 = arith.constant 0 : index
    %c0_16 = arith.constant 0 : index
    %c0_17 = arith.constant 0 : index
    %15 = vector.load %arg8[%c0_15, %c0_16, %c0_17] : memref<1x32x8xbf16, #tpu.memory_space<vmem>>, vector<1x32x8xbf16>
    %16 = vector.shape_cast %15 : vector<1x32x8xbf16> to vector<32x8xbf16>
    %cst_18 = arith.constant dense<0.000000e+00> : vector<8x8xf32>
    %17 = tpu.matmul %8, %16, %cst_18 {dimension_numbers = #tpu.dot_dimension_numbers<[1], [0], [0], [1], [0, 0, 1, 1], [], []>} : vector<8x32xbf16>, vector<32x8xbf16>, vector<8x8xf32> -> vector<8x8xf32>
    %18 = arith.truncf %11 : vector<8x8xf32> to vector<8x8xbf16>
    %19 = arith.truncf %14 : vector<8x8xf32> to vector<8x8xbf16>
    %cst_19 = arith.constant dense<0.000000e+00> : vector<8x8xf32>
    %20 = tpu.matmul %18, %19, %cst_19 {dimension_numbers = #tpu.dot_dimension_numbers<[1], [1], [0], [0], [0, 0, 1, 0], [], []>} : vector<8x8xbf16>, vector<8x8xbf16>, vector<8x8xf32> -> vector<8x8xf32>
    %cst_20 = arith.constant dense<0xFF800000> : vector<8xf32>
    %21 = vector.multi_reduction <maximumf>, %20, %cst_20 [1] : vector<8x8xf32> to vector<8xf32>
    %22 = vector.shape_cast %21 : vector<8xf32> to vector<8x1xf32>
    %23 = vector.broadcast %22 : vector<8x1xf32> to vector<8x8xf32>
    %24 = arith.subf %20, %23 : vector<8x8xf32>
    %25 = math.exp %24 : vector<8x8xf32>
    %cst_21 = arith.constant dense<0.000000e+00> : vector<8xf32>
    %26 = vector.multi_reduction <add>, %25, %cst_21 [1] : vector<8x8xf32> to vector<8xf32>
    %27 = vector.shape_cast %26 : vector<8xf32> to vector<8x1xf32>
    %28 = tpu.reciprocal %27 {approx = true} : vector<8x1xf32> -> vector<8x1xf32>
    %29 = vector.broadcast %28 : vector<8x1xf32> to vector<8x8xf32>
    %30 = arith.mulf %25, %29 : vector<8x8xf32>
    %c0_22 = arith.constant 0 : index
    %c0_23 = arith.constant 0 : index
    %c0_24 = arith.constant 0 : index
    %c0_25 = arith.constant 0 : index
    %31 = vector.load %arg13[%c0_22, %c0_23, %c0_24, %c0_25] : memref<1x1x8x8xf32, #tpu.memory_space<vmem>>, vector<1x1x8x8xf32>
    %32 = vector.shape_cast %31 : vector<1x1x8x8xf32> to vector<8x8xf32>
    %33 = vector.shape_cast %30 : vector<8x8xf32> to vector<1x1x8x8xf32>
    tpu.vector_store %arg13[%c0_22, %c0_23, %c0_24, %c0_25], %33 {strides = array<i32>} : memref<1x1x8x8xf32, #tpu.memory_space<vmem>>, vector<1x1x8x8xf32>,
    %34 = arith.truncf %30 : vector<8x8xf32> to vector<8x8xbf16>
    %35 = arith.truncf %17 : vector<8x8xf32> to vector<8x8xbf16>
    %cst_26 = arith.constant dense<0.000000e+00> : vector<8x8xf32>
    %36 = tpu.matmul %34, %35, %cst_26 {dimension_numbers = #tpu.dot_dimension_numbers<[1], [0], [0], [1], [0, 0, 1, 1], [], []>} : vector<8x8xbf16>, vector<8x8xbf16>, vector<8x8xf32> -> vector<8x8xf32>
    %37 = arith.truncf %36 : vector<8x8xf32> to vector<8x8xbf16>
    %c0_27 = arith.constant 0 : index
    %c0_28 = arith.constant 0 : index
    %c0_29 = arith.constant 0 : index
    %38 = vector.load %arg9[%c0_27, %c0_28, %c0_29] : memref<1x8x32xbf16, #tpu.memory_space<vmem>>, vector<1x8x32xbf16>
    %39 = vector.shape_cast %38 : vector<1x8x32xbf16> to vector<8x32xbf16>
    %cst_30 = arith.constant dense<0.000000e+00> : vector<8x32xf32>
    %40 = tpu.matmul %37, %39, %cst_30 {dimension_numbers = #tpu.dot_dimension_numbers<[1], [0], [0], [1], [0, 0, 1, 1], [], []>} : vector<8x8xbf16>, vector<8x32xbf16>, vector<8x32xf32> -> vector<8x32xf32>
    %c0_i32 = arith.constant 0 : i32
    %41 = arith.cmpi eq, %arg2, %c0_i32 : i32
    %42 = arith.extui %41 : i1 to i32
    %c0_i32_31 = arith.constant 0 : i32
    %43 = arith.cmpi ne, %42, %c0_i32_31 : i32
    scf.if %43 {
      %cst_37 = arith.constant 0.000000e+00 : f32
      %50 = vector.broadcast %cst_37 : f32 to vector<8x32xf32>
      %c0_38 = arith.constant 0 : index
      %c0_39 = arith.constant 0 : index
      %51 = vector.load %arg14[%c0_38, %c0_39] : memref<8x32xf32, #tpu.memory_space<vmem>>, vector<8x32xf32>
      tpu.vector_store %arg14[%c0_38, %c0_39], %50 {strides = array<i32>} : memref<8x32xf32, #tpu.memory_space<vmem>>, vector<8x32xf32>,
    } else {
    }
    %c0_32 = arith.constant 0 : index
    %c0_33 = arith.constant 0 : index
    %44 = vector.load %arg14[%c0_32, %c0_33] : memref<8x32xf32, #tpu.memory_space<vmem>>, vector<8x32xf32>
    %45 = arith.addf %44, %40 : vector<8x32xf32>
    %c0_34 = arith.constant 0 : index
    %c0_35 = arith.constant 0 : index
    %46 = vector.load %arg14[%c0_34, %c0_35] : memref<8x32xf32, #tpu.memory_space<vmem>>, vector<8x32xf32>
    tpu.vector_store %arg14[%c0_34, %c0_35], %45 {strides = array<i32>} : memref<8x32xf32, #tpu.memory_space<vmem>>, vector<8x32xf32>,
    %c3_i32 = arith.constant 3 : i32
    %47 = arith.cmpi eq, %arg2, %c3_i32 : i32
    %48 = arith.extui %47 : i1 to i32
    %c0_i32_36 = arith.constant 0 : i32
    %49 = arith.cmpi ne, %48, %c0_i32_36 : i32
    scf.if %49 {
      %c0_37 = arith.constant 0 : index
      %c0_38 = arith.constant 0 : index
      %50 = vector.load %arg14[%c0_37, %c0_38] : memref<8x32xf32, #tpu.memory_space<vmem>>, vector<8x32xf32>
      %51 = arith.addf %50, %1 : vector<8x32xf32>
      %cst_39 = arith.constant dense<0.000000e+00> : vector<8xf32>
      %52 = vector.multi_reduction <add>, %51, %cst_39 [1] : vector<8x32xf32> to vector<8xf32>
      %53 = vector.shape_cast %52 : vector<8xf32> to vector<8x1xf32>
      %cst_40 = arith.constant 3.200000e+01 : f32
      %54 = vector.broadcast %cst_40 : f32 to vector<8x1xf32>
      %55 = arith.divf %53, %54 : vector<8x1xf32>
      %56 = vector.broadcast %55 : vector<8x1xf32> to vector<8x32xf32>
      %57 = arith.subf %51, %56 : vector<8x32xf32>
      %58 = arith.mulf %57, %57 : vector<8x32xf32>
      %cst_41 = arith.constant dense<0.000000e+00> : vector<8xf32>
      %59 = vector.multi_reduction <add>, %58, %cst_41 [1] : vector<8x32xf32> to vector<8xf32>
      %60 = vector.shape_cast %59 : vector<8xf32> to vector<8x1xf32>
      %cst_42 = arith.constant 3.200000e+01 : f32
      %61 = vector.broadcast %cst_42 : f32 to vector<8x1xf32>
      %62 = arith.divf %60, %61 : vector<8x1xf32>
      %63 = vector.broadcast %55 : vector<8x1xf32> to vector<8x32xf32>
      %64 = arith.subf %51, %63 : vector<8x32xf32>
      %cst_43 = arith.constant 9.99999997E-7 : f32
      %65 = vector.broadcast %cst_43 : f32 to vector<8x1xf32>
      %66 = arith.addf %62, %65 : vector<8x1xf32>
      %67 = math.rsqrt %66 : vector<8x1xf32>
      %68 = vector.broadcast %67 : vector<8x1xf32> to vector<8x32xf32>
      %69 = arith.mulf %64, %68 : vector<8x32xf32>
      %c0_44 = arith.constant 0 : index
      %c0_45 = arith.constant 0 : index
      %70 = vector.load %arg10[%c0_44, %c0_45] : memref<1x32xf32, #tpu.memory_space<vmem>>, vector<1x32xf32>
      %71 = vector.broadcast %70 : vector<1x32xf32> to vector<8x32xf32>
      %72 = arith.mulf %69, %71 : vector<8x32xf32>
      %c0_46 = arith.constant 0 : index
      %c0_47 = arith.constant 0 : index
      %73 = vector.load %arg11[%c0_46, %c0_47] : memref<1x32xf32, #tpu.memory_space<vmem>>, vector<1x32xf32>
      %74 = vector.broadcast %73 : vector<1x32xf32> to vector<8x32xf32>
      %75 = arith.addf %72, %74 : vector<8x32xf32>
      %c0_48 = arith.constant 0 : index
      %c0_49 = arith.constant 0 : index
      %c0_50 = arith.constant 0 : index
      %76 = vector.load %arg12[%c0_48, %c0_49, %c0_50] : memref<1x8x32xf32, #tpu.memory_space<vmem>>, vector<1x8x32xf32>
      %77 = vector.shape_cast %76 : vector<1x8x32xf32> to vector<8x32xf32>
      %78 = vector.shape_cast %75 : vector<8x32xf32> to vector<1x8x32xf32>
      tpu.vector_store %arg12[%c0_48, %c0_49, %c0_50], %78 {strides = array<i32>} : memref<1x8x32xf32, #tpu.memory_space<vmem>>, vector<1x8x32xf32>,
    } else {
    }
    return
  }
  func.func @transform_0(%arg0: i32, %arg1: i32, %arg2: i32) -> (i32, i32, i32) {
    %c0_i32 = arith.constant 0 : i32
    %c0_i32_0 = arith.constant 0 : i32
    return %arg0, %arg1, %c0_i32 : i32, i32, i32
  }
  func.func @transform_1(%arg0: i32, %arg1: i32, %arg2: i32) -> (i32, i32, i32) {
    %c0_i32 = arith.constant 0 : i32
    %c0_i32_0 = arith.constant 0 : i32
    %c0_i32_1 = arith.constant 0 : i32
    return %arg0, %c0_i32, %c0_i32_0 : i32, i32, i32
  }
  func.func @transform_2(%arg0: i32, %arg1: i32, %arg2: i32) -> (i32, i32, i32) {
    %c0_i32 = arith.constant 0 : i32
    %c0_i32_0 = arith.constant 0 : i32
    %c0_i32_1 = arith.constant 0 : i32
    return %arg0, %c0_i32, %c0_i32_0 : i32, i32, i32
  }
  func.func @transform_3(%arg0: i32, %arg1: i32, %arg2: i32) -> (i32, i32, i32) {
    %c0_i32 = arith.constant 0 : i32
    %c0_i32_0 = arith.constant 0 : i32
    %c0_i32_1 = arith.constant 0 : i32
    return %arg2, %c0_i32, %c0_i32_0 : i32, i32, i32
  }
  func.func @transform_4(%arg0: i32, %arg1: i32, %arg2: i32) -> (i32, i32, i32) {
    %c0_i32 = arith.constant 0 : i32
    %c0_i32_0 = arith.constant 0 : i32
    %c0_i32_1 = arith.constant 0 : i32
    return %arg2, %c0_i32, %c0_i32_0 : i32, i32, i32
  }
  func.func @transform_5(%arg0: i32, %arg1: i32, %arg2: i32) -> (i32, i32, i32) {
    %c0_i32 = arith.constant 0 : i32
    %c0_i32_0 = arith.constant 0 : i32
    %c0_i32_1 = arith.constant 0 : i32
    return %arg2, %c0_i32, %c0_i32_0 : i32, i32, i32
  }
  func.func @transform_6(%arg0: i32, %arg1: i32, %arg2: i32) -> (i32, i32, i32) {
    %c0_i32 = arith.constant 0 : i32
    %c0_i32_0 = arith.constant 0 : i32
    %c0_i32_1 = arith.constant 0 : i32
    return %arg2, %c0_i32, %c0_i32_0 : i32, i32, i32
  }
  func.func @transform_7(%arg0: i32, %arg1: i32, %arg2: i32) -> (i32, i32) {
    %c0_i32 = arith.constant 0 : i32
    %c0_i32_0 = arith.constant 0 : i32
    %c0_i32_1 = arith.constant 0 : i32
    return %c0_i32, %c0_i32_0 : i32, i32
  }
  func.func @transform_8(%arg0: i32, %arg1: i32, %arg2: i32) -> (i32, i32) {
    %c0_i32 = arith.constant 0 : i32
    %c0_i32_0 = arith.constant 0 : i32
    %c0_i32_1 = arith.constant 0 : i32
    return %c0_i32, %c0_i32_0 : i32, i32
  }
  func.func @transform_9(%arg0: i32, %arg1: i32, %arg2: i32) -> (i32, i32, i32) {
    %c0_i32 = arith.constant 0 : i32
    %c0_i32_0 = arith.constant 0 : i32
    return %arg0, %arg1, %c0_i32 : i32, i32, i32
  }
  func.func @transform_10(%arg0: i32, %arg1: i32, %arg2: i32) -> (i32, i32, i32, i32) {
    %c0_i32 = arith.constant 0 : i32
    %c0_i32_0 = arith.constant 0 : i32
    return %arg0, %arg2, %arg1, %c0_i32 : i32, i32, i32, i32
  }
}

</mosaic_0001>

<llo_original>
// kernel: tpu_custom_call.1
$region0: #{tpu_custom_call.1}
  #allocation0 [shape = 'u32[]', space=smem, size = 0x4, offset = 0x4, fixed_abs, tag = 'smem constant byte address 0x4 - core index']
  #allocation1 [shape = 'u32[144,128]{1,0:T(1,128)}', space=vmem, size = 0x12000, scoped, tag = 'internal scratch']
  #allocation2 [shape = 'f32[8,32]{1,0:T(8,128)}', space=vmem, size = 0x1000, scoped, tag = 'scratch operand']
  %s0 = inlined_call_operand.vmem [shape: f32[2,8,32], index: 0, kind: input, shape index: {}]
  %s1 = inlined_call_operand.vmem [shape: f32[2,8,32], index: 1, kind: input, shape index: {}]
  %s2 = inlined_call_operand.vmem [shape: f32[2,8,32], index: 2, kind: input, shape index: {}]
  %s3 = inlined_call_operand.vmem [shape: bf16[4,32,8], index: 3, kind: input, shape index: {}]
  %s4 = inlined_call_operand.vmem [shape: bf16[4,32,8], index: 4, kind: input, shape index: {}]
  %s5 = inlined_call_operand.vmem [shape: bf16[4,32,8], index: 5, kind: input, shape index: {}]
  %s6 = inlined_call_operand.vmem [shape: bf16[4,8,32], index: 6, kind: input, shape index: {}]
  %s7 = inlined_call_operand.vmem [shape: f32[1,32], index: 7, kind: input, shape index: {}]
  %s8 = inlined_call_operand.vmem [shape: f32[1,32], index: 8, kind: input, shape index: {}]
  %s9 = inlined_call_operand.hbm [shape: f32[2,8,32], index: 9, kind: output, shape index: {0}]
  %s10 = inlined_call_operand.hbm [shape: f32[2,4,8,8], index: 10, kind: output, shape index: {1}]
  %11 = xla_tuple %s9, %s10
  %s12 = sld [smem:[#allocation0]]
  $region85: #{tpu_custom_call.1} parent=0
    _
  %s14 = ssub.s32 1, %s12
  %s15 = scalar_select 0, %s14, %s12
  $region1: #{tpu_custom_call.1} parent=0
    #allocation3 [shape = 'u8[8192]{0}', space=vmem, size = 0x2000, scoped, tag = 'output window, operand 0']
    #allocation4 [shape = 's32[2]{0}', space=sflag, size = 0x8, scoped, tag = 'scoped memory for tpu_custom_call.1']
    #allocation5 [shape = 'u8[8192]{0}', space=vmem, size = 0x2000, scoped, tag = 'output window, operand 1']
    #allocation6 [shape = 's32[2]{0}', space=sflag, size = 0x8, scoped, tag = 'scoped memory for tpu_custom_call.1']
    %16 = vsyncpa [#allocation4], 0
    %s17 = scalar_lea.sflag [#allocation4], 1
    %18 = vsyncpa %s17, 0
    %19 = vsyncpa [#allocation6], 0
    %s20 = scalar_lea.sflag [#allocation6], 1
    %21 = vsyncpa %s20, 0
    loop: start=0, step=1, limit=10
    $region2: #{tpu_custom_call.1} parent=1 // loop_pre_header
      _
    $region3: #{tpu_custom_call.1} parent=1 // loop_header
      %s23 = sphi 0, %s27
      %p24 = scmp.ge.s32.totalorder %s23, 10
      %s30 = sphi 0, %s49
      %s31 = sphi 0, %s45
      %s32 = sphi 0, %s41
      %s33 = sphi 0, %s30
      %s34 = sphi 0, %s31
      %s35 = sphi 0, %s32
      %s36 = sphi 0, %s33
      %s37 = sphi 0, %s34
      %s38 = sphi 0, %s35
      %s54 = sphi 0, %s56
      %s57 = sphi 0, %s54
      %s58 = sphi 0, %s57
      %s74 = sphi 0, %s58
      %s80 = sphi 0, %s82
      %s83 = sphi 0, %s80
      %s84 = sphi 0, %s83
      %s100 = sphi 0, %s84
      %s106 = sphi 0, %s108
      %s109 = sphi 0, %s106
      %s110 = sphi 0, %s109
      %s126 = sphi 0, %s110
      %s132 = sphi 0, %s134
      %s135 = sphi 0, %s132
      %s136 = sphi 0, %s135
      %s152 = sphi 0, %s136
      %s158 = sphi 0, %s160
      %s161 = sphi 0, %s158
      %s162 = sphi 0, %s161
      %s178 = sphi 0, %s162
      %s184 = sphi 0, %s186
      %s187 = sphi 0, %s184
      %s188 = sphi 0, %s187
      %s204 = sphi 0, %s188
      %s210 = sphi 0, %s212
      %s213 = sphi 0, %s210
      %s214 = sphi 0, %s213
      %s230 = sphi 0, %s214
      %s234 = sphi 0, %s234
      %s236 = sphi 0, %s234
      %s237 = sphi 0, %s236
      %s251 = sphi 0, %s237
      %s255 = sphi 0, %s255
      %s257 = sphi 0, %s255
      %s258 = sphi 0, %s257
      %s272 = sphi 0, %s258
      %s280 = sphi 0, %s282
      %s283 = sphi 0, %s280
      %s284 = sphi 0, %s283
      %s300 = sphi 0, %s284
      %s310 = sphi 0, %s312
      %s313 = sphi 0, %s310
      %s314 = sphi 0, %s313
      %s330 = sphi 0, %s314
    $region4: #{tpu_custom_call.1} parent=1 // loop_header_branch
      %26 = sbr.rel (%p24) target = $region8
    $region5: #{tpu_custom_call.1} parent=1 // loop_body
      %s28 = ssub.s32 %s23, 1
      %s29 = ssub.s32 %s23, 2
      %s39 = sadd.s32 1, %s32
      %p40 = scmp.ge.s32.totalorder %s39, 4
      %s41 = scalar_select %p40, 0, %s39
      %s42 = sadd.s32 1, %s31
      %s43 = scalar_select %p40, %s42, %s31
      %p44 = scmp.ge.s32.totalorder %s43, 1
      %s45 = scalar_select %p44, 0, %s43
      %s46 = sadd.s32 1, %s30
      %s47 = scalar_select %p44, %s46, %s30
      %p48 = scmp.ge.s32.totalorder %s47, 2
      %s49 = scalar_select %p48, 0, %s47
      %s50 = ssub.s32 %s30, %s49
      %s51 = ssub.s32 %s31, %s45
      %s52 = sor.u32 %s50, %s51
      %p53 = scmp.eq.s32.totalorder %s52, 0
      %s55 = sadd.s32 %s54, 1
      %s56 = scalar_select %p53, %s54, %s55
      %p59 = pneg %p53
      %p60 = scmp.eq.s32.totalorder %s23, 7
      %p61 = por %p59, %p60
      %p62 = scmp.ne.s32.totalorder %s54, %s57
      %p63 = scmp.eq.s32.totalorder %s23, 0
      %p64 = por %p62, %p63
      %p65 = scmp.ne.s32.totalorder %s54, %s57
      %p66 = scmp.eq.s32.totalorder %s28, 7
      %p67 = por %p65, %p66
      %p68 = scmp.ne.s32.totalorder %s57, %s58
      %p69 = scmp.eq.s32.totalorder %s28, 0
      %p70 = por %p68, %p69
      %p71 = scmp.ne.s32.totalorder %s57, %s58
      %p72 = scmp.eq.s32.totalorder %s29, 7
      %p73 = por %p71, %p72
      %p75 = scmp.ne.s32.totalorder %s58, %s74
      %p76 = scmp.eq.s32.totalorder %s29, 0
      %p77 = por %p75, %p76
      %s78 = ssub.s32 %s30, %s49
      %p79 = scmp.eq.s32.totalorder %s78, 0
      %s81 = sadd.s32 %s80, 1
      %s82 = scalar_select %p79, %s80, %s81
      %p85 = pneg %p79
      %p86 = scmp.eq.s32.totalorder %s23, 7
      %p87 = por %p85, %p86
      %p88 = scmp.ne.s32.totalorder %s80, %s83
      %p89 = scmp.eq.s32.totalorder %s23, 0
      %p90 = por %p88, %p89
      %p91 = scmp.ne.s32.totalorder %s80, %s83
      %p92 = scmp.eq.s32.totalorder %s28, 7
      %p93 = por %p91, %p92
      %p94 = scmp.ne.s32.totalorder %s83, %s84
      %p95 = scmp.eq.s32.totalorder %s28, 0
      %p96 = por %p94, %p95
      %p97 = scmp.ne.s32.totalorder %s83, %s84
      %p98 = scmp.eq.s32.totalorder %s29, 7
      %p99 = por %p97, %p98
      %p101 = scmp.ne.s32.totalorder %s84, %s100
      %p102 = scmp.eq.s32.totalorder %s29, 0
      %p103 = por %p101, %p102
      %s104 = ssub.s32 %s30, %s49
      %p105 = scmp.eq.s32.totalorder %s104, 0
      %s107 = sadd.s32 %s106, 1
      %s108 = scalar_select %p105, %s106, %s107
      %p111 = pneg %p105
      %p112 = scmp.eq.s32.totalorder %s23, 7
      %p113 = por %p111, %p112
      %p114 = scmp.ne.s32.totalorder %s106, %s109
      %p115 = scmp.eq.s32.totalorder %s23, 0
      %p116 = por %p114, %p115
      %p117 = scmp.ne.s32.totalorder %s106, %s109
      %p118 = scmp.eq.s32.totalorder %s28, 7
      %p119 = por %p117, %p118
      %p120 = scmp.ne.s32.totalorder %s109, %s110
      %p121 = scmp.eq.s32.totalorder %s28, 0
      %p122 = por %p120, %p121
      %p123 = scmp.ne.s32.totalorder %s109, %s110
      %p124 = scmp.eq.s32.totalorder %s29, 7
      %p125 = por %p123, %p124
      %p127 = scmp.ne.s32.totalorder %s110, %s126
      %p128 = scmp.eq.s32.totalorder %s29, 0
      %p129 = por %p127, %p128
      %s130 = ssub.s32 %s32, %s41
      %p131 = scmp.eq.s32.totalorder %s130, 0
      %s133 = sadd.s32 %s132, 1
      %s134 = scalar_select %p131, %s132, %s133
      %p137 = pneg %p131
      %p138 = scmp.eq.s32.totalorder %s23, 7
      %p139 = por %p137, %p138
      %p140 = scmp.ne.s32.totalorder %s132, %s135
      %p141 = scmp.eq.s32.totalorder %s23, 0
      %p142 = por %p140, %p141
      %p143 = scmp.ne.s32.totalorder %s132, %s135
      %p144 = scmp.eq.s32.totalorder %s28, 7
      %p145 = por %p143, %p144
      %p146 = scmp.ne.s32.totalorder %s135, %s136
      %p147 = scmp.eq.s32.totalorder %s28, 0
      %p148 = por %p146, %p147
      %p149 = scmp.ne.s32.totalorder %s135, %s136
      %p150 = scmp.eq.s32.totalorder %s29, 7
      %p151 = por %p149, %p150
      %p153 = scmp.ne.s32.totalorder %s136, %s152
      %p154 = scmp.eq.s32.totalorder %s29, 0
      %p155 = por %p153, %p154
      %s156 = ssub.s32 %s32, %s41
      %p157 = scmp.eq.s32.totalorder %s156, 0
      %s159 = sadd.s32 %s158, 1
      %s160 = scalar_select %p157, %s158, %s159
      %p163 = pneg %p157
      %p164 = scmp.eq.s32.totalorder %s23, 7
      %p165 = por %p163, %p164
      %p166 = scmp.ne.s32.totalorder %s158, %s161
      %p167 = scmp.eq.s32.totalorder %s23, 0
      %p168 = por %p166, %p167
      %p169 = scmp.ne.s32.totalorder %s158, %s161
      %p170 = scmp.eq.s32.totalorder %s28, 7
      %p171 = por %p169, %p170
      %p172 = scmp.ne.s32.totalorder %s161, %s162
      %p173 = scmp.eq.s32.totalorder %s28, 0
      %p174 = por %p172, %p173
      %p175 = scmp.ne.s32.totalorder %s161, %s162
      %p176 = scmp.eq.s32.totalorder %s29, 7
      %p177 = por %p175, %p176
      %p179 = scmp.ne.s32.totalorder %s162, %s178
      %p180 = scmp.eq.s32.totalorder %s29, 0
      %p181 = por %p179, %p180
      %s182 = ssub.s32 %s32, %s41
      %p183 = scmp.eq.s32.totalorder %s182, 0
      %s185 = sadd.s32 %s184, 1
      %s186 = scalar_select %p183, %s184, %s185
      %p189 = pneg %p183
      %p190 = scmp.eq.s32.totalorder %s23, 7
      %p191 = por %p189, %p190
      %p192 = scmp.ne.s32.totalorder %s184, %s187
      %p193 = scmp.eq.s32.totalorder %s23, 0
      %p194 = por %p192, %p193
      %p195 = scmp.ne.s32.totalorder %s184, %s187
      %p196 = scmp.eq.s32.totalorder %s28, 7
      %p197 = por %p195, %p196
      %p198 = scmp.ne.s32.totalorder %s187, %s188
      %p199 = scmp.eq.s32.totalorder %s28, 0
      %p200 = por %p198, %p199
      %p201 = scmp.ne.s32.totalorder %s187, %s188
      %p202 = scmp.eq.s32.totalorder %s29, 7
      %p203 = por %p201, %p202
      %p205 = scmp.ne.s32.totalorder %s188, %s204
      %p206 = scmp.eq.s32.totalorder %s29, 0
      %p207 = por %p205, %p206
      %s208 = ssub.s32 %s32, %s41
      %p209 = scmp.eq.s32.totalorder %s208, 0
      %s211 = sadd.s32 %s210, 1
      %s212 = scalar_select %p209, %s210, %s211
      %p215 = pneg %p209
      %p216 = scmp.eq.s32.totalorder %s23, 7
      %p217 = por %p215, %p216
      %p218 = scmp.ne.s32.totalorder %s210, %s213
      %p219 = scmp.eq.s32.totalorder %s23, 0
      %p220 = por %p218, %p219
      %p221 = scmp.ne.s32.totalorder %s210, %s213
      %p222 = scmp.eq.s32.totalorder %s28, 7
      %p223 = por %p221, %p222
      %p224 = scmp.ne.s32.totalorder %s213, %s214
      %p225 = scmp.eq.s32.totalorder %s28, 0
      %p226 = por %p224, %p225
      %p227 = scmp.ne.s32.totalorder %s213, %s214
      %p228 = scmp.eq.s32.totalorder %s29, 7
      %p229 = por %p227, %p228
      %p231 = scmp.ne.s32.totalorder %s214, %s230
      %p232 = scmp.eq.s32.totalorder %s29, 0
      %p233 = por %p231, %p232
      %s235 = sadd.s32 %s234, 1
      %p238 = scmp.eq.s32.totalorder %s23, 7
      %p239 = scmp.ne.s32.totalorder %s234, %s236
      %p240 = scmp.eq.s32.totalorder %s23, 0
      %p241 = por %p239, %p240
      %p242 = scmp.ne.s32.totalorder %s234, %s236
      %p243 = scmp.eq.s32.totalorder %s28, 7
      %p244 = por %p242, %p243
      %p245 = scmp.ne.s32.totalorder %s236, %s237
      %p246 = scmp.eq.s32.totalorder %s28, 0
      %p247 = por %p245, %p246
      %p248 = scmp.ne.s32.totalorder %s236, %s237
      %p249 = scmp.eq.s32.totalorder %s29, 7
      %p250 = por %p248, %p249
      %p252 = scmp.ne.s32.totalorder %s237, %s251
      %p253 = scmp.eq.s32.totalorder %s29, 0
      %p254 = por %p252, %p253
      %s256 = sadd.s32 %s255, 1
      %p259 = scmp.eq.s32.totalorder %s23, 7
      %p260 = scmp.ne.s32.totalorder %s255, %s257
      %p261 = scmp.eq.s32.totalorder %s23, 0
      %p262 = por %p260, %p261
      %p263 = scmp.ne.s32.totalorder %s255, %s257
      %p264 = scmp.eq.s32.totalorder %s28, 7
      %p265 = por %p263, %p264
      %p266 = scmp.ne.s32.totalorder %s257, %s258
      %p267 = scmp.eq.s32.totalorder %s28, 0
      %p268 = por %p266, %p267
      %p269 = scmp.ne.s32.totalorder %s257, %s258
      %p270 = scmp.eq.s32.totalorder %s29, 7
      %p271 = por %p269, %p270
      %p273 = scmp.ne.s32.totalorder %s258, %s272
      %p274 = scmp.eq.s32.totalorder %s29, 0
      %p275 = por %p273, %p274
      %s276 = ssub.s32 %s30, %s49
      %s277 = ssub.s32 %s31, %s45
      %s278 = sor.u32 %s276, %s277
      %p279 = scmp.eq.s32.totalorder %s278, 0
      %s281 = sadd.s32 %s280, 1
      %s282 = scalar_select %p279, %s280, %s281
      %p285 = pneg %p279
      %p286 = scmp.eq.s32.totalorder %s23, 7
      %p287 = por %p285, %p286
      %p288 = scmp.ne.s32.totalorder %s280, %s283
      %p289 = scmp.eq.s32.totalorder %s23, 0
      %p290 = por %p288, %p289
      %p291 = scmp.ne.s32.totalorder %s280, %s283
      %p292 = scmp.eq.s32.totalorder %s28, 7
      %p293 = por %p291, %p292
      %p294 = scmp.ne.s32.totalorder %s283, %s284
      %p295 = scmp.eq.s32.totalorder %s28, 0
      %p296 = por %p294, %p295
      %p297 = scmp.ne.s32.totalorder %s283, %s284
      %p298 = scmp.eq.s32.totalorder %s29, 7
      %p299 = por %p297, %p298
      %p301 = scmp.ne.s32.totalorder %s284, %s300
      %p302 = scmp.eq.s32.totalorder %s29, 0
      %p303 = por %p301, %p302
      %s304 = ssub.s32 %s30, %s49
      %s305 = ssub.s32 %s32, %s41
      %s306 = sor.u32 %s304, %s305
      %s307 = ssub.s32 %s31, %s45
      %s308 = sor.u32 %s306, %s307
      %p309 = scmp.eq.s32.totalorder %s308, 0
      %s311 = sadd.s32 %s310, 1
      %s312 = scalar_select %p309, %s310, %s311
      %p315 = pneg %p309
      %p316 = scmp.eq.s32.totalorder %s23, 7
      %p317 = por %p315, %p316
      %p318 = scmp.ne.s32.totalorder %s310, %s313
      %p319 = scmp.eq.s32.totalorder %s23, 0
      %p320 = por %p318, %p319
      %p321 = scmp.ne.s32.totalorder %s310, %s313
      %p322 = scmp.eq.s32.totalorder %s28, 7
      %p323 = por %p321, %p322
      %p324 = scmp.ne.s32.totalorder %s313, %s314
      %p325 = scmp.eq.s32.totalorder %s28, 0
      %p326 = por %p324, %p325
      %p327 = scmp.ne.s32.totalorder %s313, %s314
      %p328 = scmp.eq.s32.totalorder %s29, 7
      %p329 = por %p327, %p328
      %p331 = scmp.ne.s32.totalorder %s314, %s330
      %p332 = scmp.eq.s32.totalorder %s29, 0
      %p333 = por %p331, %p332
      %p334 = scmp.le.s32.totalorder 1, %s23
      %p335 = scmp.lt.s32.totalorder %s23, 9
      %p336 = pnand %p334, %p335
      %p337 = pneg %p336
      // Predicated region
      $region9: #{tpu_custom_call.1} parent=5 // pred_check
        _
      $region10: #{tpu_custom_call.1} parent=5 // pred_check_branch
        %339 = sbr.rel (%p336) target = $region12
      $region11: #{tpu_custom_call.1} parent=5 // pred_region
        %s340 = ssub.s32 %s23, 1
        // Predicated region
        $region13: #{tpu_custom_call.1} parent=11 // pred_check
          %p341 = pneg %p247
        $region14: #{tpu_custom_call.1} parent=11 // pred_check_branch
          %343 = sbr.rel (%p341) target = $region16
        $region15: #{tpu_custom_call.1} parent=11 // pred_region
          _
        $region16: #{tpu_custom_call.1} parent=11 // pred_fallthru
          _
        // Predicated region
        $region17: #{tpu_custom_call.1} parent=11 // pred_check
          %p344 = pneg %p268
        $region18: #{tpu_custom_call.1} parent=11 // pred_check_branch
          %346 = sbr.rel (%p344) target = $region20
        $region19: #{tpu_custom_call.1} parent=11 // pred_region
          _
        $region20: #{tpu_custom_call.1} parent=11 // pred_fallthru
          _
      $region12: #{tpu_custom_call.1} parent=5 // pred_fallthru
        _
      %p347 = scmp.lt.s32.totalorder %s23, 8
      // Predicated region
      $region21: #{tpu_custom_call.1} parent=5 // pred_check
        %p348 = pneg %p347
      $region22: #{tpu_custom_call.1} parent=5 // pred_check_branch
        %350 = sbr.rel (%p348) target = $region24
      $region23: #{tpu_custom_call.1} parent=5 // pred_region
        // Predicated region
        $region25: #{tpu_custom_call.1} parent=23 // pred_check
          %p351 = pneg %p64
        $region26: #{tpu_custom_call.1} parent=23 // pred_check_branch
          %353 = sbr.rel (%p351) target = $region28
        $region27: #{tpu_custom_call.1} parent=23 // pred_region
          %p354 = scmp.lt.s32.totalorder %s30, 1
          %s355 = scalar_select %p354, %s30, 1
          %p356 = scmp.lt.s32.totalorder %s31, 0
          %s357 = scalar_select %p356, %s31, 0
          %s358 = sadd.s32 %s357, %s355
          %s359 = smul.addr %s358, 8
          %s360 = scalar_lea.vmem %s0, %s359
        $region28: #{tpu_custom_call.1} parent=23 // pred_fallthru
          _
        // Predicated region
        $region29: #{tpu_custom_call.1} parent=23 // pred_check
          %p361 = pneg %p90
        $region30: #{tpu_custom_call.1} parent=23 // pred_check_branch
          %363 = sbr.rel (%p361) target = $region32
        $region31: #{tpu_custom_call.1} parent=23 // pred_region
          %p364 = scmp.lt.s32.totalorder %s30, 1
          %s365 = scalar_select %p364, %s30, 1
          %s366 = smul.addr %s365, 8
          %s367 = scalar_lea.vmem %s1, %s366
        $region32: #{tpu_custom_call.1} parent=23 // pred_fallthru
          _
        // Predicated region
        $region33: #{tpu_custom_call.1} parent=23 // pred_check
          %p368 = pneg %p116
        $region34: #{tpu_custom_call.1} parent=23 // pred_check_branch
          %370 = sbr.rel (%p368) target = $region36
        $region35: #{tpu_custom_call.1} parent=23 // pred_region
          %p371 = scmp.lt.s32.totalorder %s30, 1
          %s372 = scalar_select %p371, %s30, 1
          %s373 = smul.addr %s372, 8
          %s374 = scalar_lea.vmem %s2, %s373
        $region36: #{tpu_custom_call.1} parent=23 // pred_fallthru
          _
        // Predicated region
        $region37: #{tpu_custom_call.1} parent=23 // pred_check
          %p375 = pneg %p142
        $region38: #{tpu_custom_call.1} parent=23 // pred_check_branch
          %377 = sbr.rel (%p375) target = $region40
        $region39: #{tpu_custom_call.1} parent=23 // pred_region
          %p378 = scmp.lt.s32.totalorder %s32, 3
          %s379 = scalar_select %p378, %s32, 3
          %s380 = smul.addr %s379, 4
          %s381 = smul.addr %s380, 4
          %s382 = scalar_lea.vmem %s3, %s381
        $region40: #{tpu_custom_call.1} parent=23 // pred_fallthru
          _
        // Predicated region
        $region41: #{tpu_custom_call.1} parent=23 // pred_check
          %p383 = pneg %p168
        $region42: #{tpu_custom_call.1} parent=23 // pred_check_branch
          %385 = sbr.rel (%p383) target = $region44
        $region43: #{tpu_custom_call.1} parent=23 // pred_region
          %p386 = scmp.lt.s32.totalorder %s32, 3
          %s387 = scalar_select %p386, %s32, 3
          %s388 = smul.addr %s387, 4
          %s389 = smul.addr %s388, 4
          %s390 = scalar_lea.vmem %s4, %s389
        $region44: #{tpu_custom_call.1} parent=23 // pred_fallthru
          _
        // Predicated region
        $region45: #{tpu_custom_call.1} parent=23 // pred_check
          %p391 = pneg %p194
        $region46: #{tpu_custom_call.1} parent=23 // pred_check_branch
          %393 = sbr.rel (%p391) target = $region48
        $region47: #{tpu_custom_call.1} parent=23 // pred_region
          %p394 = scmp.lt.s32.totalorder %s32, 3
          %s395 = scalar_select %p394, %s32, 3
          %s396 = smul.addr %s395, 4
          %s397 = smul.addr %s396, 4
          %s398 = scalar_lea.vmem %s5, %s397
        $region48: #{tpu_custom_call.1} parent=23 // pred_fallthru
          _
        // Predicated region
        $region49: #{tpu_custom_call.1} parent=23 // pred_check
          %p399 = pneg %p220
        $region50: #{tpu_custom_call.1} parent=23 // pred_check_branch
          %401 = sbr.rel (%p399) target = $region52
        $region51: #{tpu_custom_call.1} parent=23 // pred_region
          %p402 = scmp.lt.s32.totalorder %s32, 3
          %s403 = scalar_select %p402, %s32, 3
          %s404 = smul.addr %s403, 4
          %s405 = scalar_lea.vmem %s6, %s404
        $region52: #{tpu_custom_call.1} parent=23 // pred_fallthru
          _
      $region24: #{tpu_custom_call.1} parent=5 // pred_fallthru
        _
      %p406 = scmp.le.s32.totalorder 1, %s23
      %p407 = scmp.lt.s32.totalorder %s23, 9
      %p408 = pnand %p406, %p407
      %p409 = pneg %p408
      // Predicated region
      $region53: #{tpu_custom_call.1} parent=5 // pred_check
        _
      $region54: #{tpu_custom_call.1} parent=5 // pred_check_branch
        %411 = sbr.rel (%p408) target = $region56
      $region55: #{tpu_custom_call.1} parent=5 // pred_region
        %s412 = ssub.s32 %s23, 1
        %p413 = scmp.lt.s32.totalorder %s33, 1
        %s414 = scalar_select %p413, %s33, 1
        %p415 = scmp.lt.s32.totalorder %s34, 0
        %s416 = scalar_select %p415, %s34, 0
        %s417 = sadd.s32 %s416, %s414
        %s418 = smul.addr %s417, 8
        %s419 = scalar_lea.vmem %s0, %s418
        %p420 = pneg %p70
        %p421 = pneg %p67
        %p422 = scmp.lt.s32.totalorder %s33, 1
        %s423 = scalar_select %p422, %s33, 1
        %s424 = smul.addr %s423, 8
        %s425 = scalar_lea.vmem %s1, %s424
        %p426 = pneg %p96
        %p427 = pneg %p93
        %p428 = scmp.lt.s32.totalorder %s33, 1
        %s429 = scalar_select %p428, %s33, 1
        %s430 = smul.addr %s429, 8
        %s431 = scalar_lea.vmem %s2, %s430
        %p432 = pneg %p122
        %p433 = pneg %p119
        %p434 = scmp.lt.s32.totalorder %s35, 3
        %s435 = scalar_select %p434, %s35, 3
        %s436 = smul.addr %s435, 4
        %s437 = smul.addr %s436, 4
        %s438 = scalar_lea.vmem %s3, %s437
        %p439 = pneg %p148
        %p440 = pneg %p145
        %p441 = scmp.lt.s32.totalorder %s35, 3
        %s442 = scalar_select %p441, %s35, 3
        %s443 = smul.addr %s442, 4
        %s444 = smul.addr %s443, 4
        %s445 = scalar_lea.vmem %s4, %s444
        %p446 = pneg %p174
        %p447 = pneg %p171
        %p448 = scmp.lt.s32.totalorder %s35, 3
        %s449 = scalar_select %p448, %s35, 3
        %s450 = smul.addr %s449, 4
        %s451 = smul.addr %s450, 4
        %s452 = scalar_lea.vmem %s5, %s451
        %p453 = pneg %p200
        %p454 = pneg %p197
        %p455 = scmp.lt.s32.totalorder %s35, 3
        %s456 = scalar_select %p455, %s35, 3
        %s457 = smul.addr %s456, 4
        %s458 = scalar_lea.vmem %s6, %s457
        %p459 = pneg %p226
        %p460 = pneg %p223
        %p461 = pneg %p247
        %p462 = pneg %p244
        %p463 = pneg %p268
        %p464 = pneg %p265
        %p465 = pneg %p296
        %p466 = pneg %p293
        %s467 = sand.u32 %s283, 1
        %s468 = scalar_lea.sflag [#allocation4], %s467
        %s469 = sand.u32 %s283, 1
        %s470 = smul.addr %s469, 8
        %s471 = scalar_lea.vmem [#allocation3], %s470
        %p472 = pneg %p326
        %p473 = pneg %p323
        %s474 = sand.u32 %s313, 1
        %s475 = scalar_lea.sflag [#allocation6], %s474
        %s476 = sand.u32 %s313, 1
        %s477 = smul.addr %s476, 8
        %s478 = scalar_lea.vmem [#allocation5], %s477
        %p479 = scmp.lt.s32.totalorder %s33, 1
        %s480 = scalar_select %p479, %s33, 1
        %p481 = scmp.lt.s32.totalorder %s34, 0
        %s482 = scalar_select %p481, %s34, 0
        %s483 = sadd.s32 %s482, %s480
        %s484 = smul.addr %s483, 8
        %s485 = scalar_lea.vmem %s0, %s484
        %p486 = scmp.lt.s32.totalorder %s33, 1
        %s487 = scalar_select %p486, %s33, 1
        %s488 = smul.addr %s487, 8
        %s489 = scalar_lea.vmem %s1, %s488
        %p490 = scmp.lt.s32.totalorder %s33, 1
        %s491 = scalar_select %p490, %s33, 1
        %s492 = smul.addr %s491, 8
        %s493 = scalar_lea.vmem %s2, %s492
        %p494 = scmp.lt.s32.totalorder %s35, 3
        %s495 = scalar_select %p494, %s35, 3
        %s496 = smul.addr %s495, 4
        %s497 = smul.addr %s496, 4
        %s498 = scalar_lea.vmem %s3, %s497
        %p499 = scmp.lt.s32.totalorder %s35, 3
        %s500 = scalar_select %p499, %s35, 3
        %s501 = smul.addr %s500, 4
        %s502 = smul.addr %s501, 4
        %s503 = scalar_lea.vmem %s4, %s502
        %p504 = scmp.lt.s32.totalorder %s35, 3
        %s505 = scalar_select %p504, %s35, 3
        %s506 = smul.addr %s505, 4
        %s507 = smul.addr %s506, 4
        %s508 = scalar_lea.vmem %s5, %s507
        %p509 = scmp.lt.s32.totalorder %s35, 3
        %s510 = scalar_select %p509, %s35, 3
        %s511 = smul.addr %s510, 4
        %s512 = scalar_lea.vmem %s6, %s511
        %v514 = vld [vmem:[%s485] sm:$0xff]
        %v515 = vpack.c.bf16 %v514, %v514
        %v516 = vld [vmem:[%s489] sm:$0xff]
        %v517 = vpack.c.bf16 %v516, %v516
        %v518 = vld [vmem:[%s493] sm:$0xff]
        %v519 = vpack.c.bf16 %v518, %v518
        %v520 = vld [vmem:[%s498] sm:$0xf]
        %v521 = vld [vmem:[%s498 + $0x4] sm:$0xf]
        %v522 = vld [vmem:[%s498 + $0x8] sm:$0xf]
        %v523 = vld [vmem:[%s498 + $0xc] sm:$0xf]
        %v528 = vunpack.c.l.b16 %v520
        %v529 = vunpack.c.l.b16 %v521
        %v530 = vunpack.c.l.b16 %v522
        %v531 = vunpack.c.l.b16 %v523
        %v532 = vpack.c.b16 %v529, %v528
        %v533 = vpack.c.b16 %v531, %v530
        %vm536 = vcmask 261120
        %v538 = vsel %vm536, %v515, 0
        %540 = vmatprep.subr.bf16.mxu0 0
        %541 = vmatpush1.bf16.msra.mxu0 %v532
        %542 = vmatprep.subr.bf16.mxu0 0
        %543 = vmatpush1.bf16.msra.mxu0 %v533
        %544 = vmatprep.subr.bf16.mxu0 0
        %545 = vmatpush1.bf16.msra.mxu0 0
        %546 = vmatprep.subr.bf16.mxu0 0
        %547 = vmatpush1.bf16.msra.mxu0 0
        %548 = vmatprep.subr.bf16.mxu0 0
        %549 = vmatpush1.bf16.msra.mxu0 0
        %550 = vmatprep.subr.bf16.mxu0 0
        %551 = vmatpush1.bf16.msra.mxu0 0
        %552 = vmatprep.subr.bf16.mxu0 0
        %553 = vmatpush1.bf16.msra.mxu0 0
        %554 = vmatprep.subr.bf16.mxu0 0
        %555 = vmatpush1.bf16.msra.mxu0 0
        %556 = vmatprep.subr.bf16.mxu0 0
        %557 = vmatpush1.bf16.msra.mxu0 0
        %558 = vmatprep.subr.bf16.mxu0 0
        %559 = vmatpush1.bf16.msra.mxu0 0
        %560 = vmatprep.subr.bf16.mxu0 0
        %561 = vmatpush1.bf16.msra.mxu0 0
        %562 = vmatprep.subr.bf16.mxu0 0
        %563 = vmatpush1.bf16.msra.mxu0 0
        %564 = vmatprep.subr.bf16.mxu0 0
        %565 = vmatpush1.bf16.msra.mxu0 0
        %566 = vmatprep.subr.bf16.mxu0 0
        %567 = vmatpush1.bf16.msra.mxu0 0
        %568 = vmatprep.subr.bf16.mxu0 0
        %569 = vmatpush1.bf16.msra.mxu0 0
        %570 = vmatprep.subr.bf16.mxu0 0
        %571 = vmatpush1.bf16.msra.mxu0 0
        %572 = vmatprep.mubr.bf16.mxu0 0
        %573 = vmatmul.mubr.bf16.gmra.mrb[0].mxu0 %v538
        %v574 = vpop.f32.mrb[0].mxu0
        %v575 = vadd.f32 0.0, %v574
        %v576 = vpop.f32.mrb[0].mxu0
        %v577 = vpop.f32.mrb[0].mxu0
        %v578 = vpop.f32.mrb[0].mxu0
        %579 = vdwg.mxu0
        %v580 = vld [vmem:[%s503] sm:$0xf]
        %v581 = vld [vmem:[%s503 + $0x4] sm:$0xf]
        %v582 = vld [vmem:[%s503 + $0x8] sm:$0xf]
        %v583 = vld [vmem:[%s503 + $0xc] sm:$0xf]
        %v588 = vunpack.c.l.b16 %v580
        %v589 = vunpack.c.l.b16 %v581
        %v590 = vunpack.c.l.b16 %v582
        %v591 = vunpack.c.l.b16 %v583
        %v592 = vpack.c.b16 %v589, %v588
        %v593 = vpack.c.b16 %v591, %v590
        %v597 = vsel %vm536, %v517, 0
        %599 = vmatprep.subr.bf16.mxu0 0
        %600 = vmatpush1.bf16.msra.mxu0 %v592
        %601 = vmatprep.subr.bf16.mxu0 0
        %602 = vmatpush1.bf16.msra.mxu0 %v593
        %603 = vmatprep.subr.bf16.mxu0 0
        %604 = vmatpush1.bf16.msra.mxu0 0
        %605 = vmatprep.subr.bf16.mxu0 0
        %606 = vmatpush1.bf16.msra.mxu0 0
        %607 = vmatprep.subr.bf16.mxu0 0
        %608 = vmatpush1.bf16.msra.mxu0 0
        %609 = vmatprep.subr.bf16.mxu0 0
        %610 = vmatpush1.bf16.msra.mxu0 0
        %611 = vmatprep.subr.bf16.mxu0 0
        %612 = vmatpush1.bf16.msra.mxu0 0
        %613 = vmatprep.subr.bf16.mxu0 0
        %614 = vmatpush1.bf16.msra.mxu0 0
        %615 = vmatprep.subr.bf16.mxu0 0
        %616 = vmatpush1.bf16.msra.mxu0 0
        %617 = vmatprep.subr.bf16.mxu0 0
        %618 = vmatpush1.bf16.msra.mxu0 0
        %619 = vmatprep.subr.bf16.mxu0 0
        %620 = vmatpush1.bf16.msra.mxu0 0
        %621 = vmatprep.subr.bf16.mxu0 0
        %622 = vmatpush1.bf16.msra.mxu0 0
        %623 = vmatprep.subr.bf16.mxu0 0
        %624 = vmatpush1.bf16.msra.mxu0 0
        %625 = vmatprep.subr.bf16.mxu0 0
        %626 = vmatpush1.bf16.msra.mxu0 0
        %627 = vmatprep.subr.bf16.mxu0 0
        %628 = vmatpush1.bf16.msra.mxu0 0
        %629 = vmatprep.subr.bf16.mxu0 0
        %630 = vmatpush1.bf16.msra.mxu0 0
        %631 = vmatprep.mubr.bf16.mxu0 0
        %632 = vmatmul.mubr.bf16.gmra.mrb[0].mxu0 %v597
        %v633 = vpop.f32.mrb[0].mxu0
        %v634 = vadd.f32 0.0, %v633
        %v635 = vpop.f32.mrb[0].mxu0
        %v636 = vpop.f32.mrb[0].mxu0
        %v637 = vpop.f32.mrb[0].mxu0
        %638 = vdwg.mxu0
        %v639 = vld [vmem:[%s508] sm:$0xf]
        %v640 = vld [vmem:[%s508 + $0x4] sm:$0xf]
        %v641 = vld [vmem:[%s508 + $0x8] sm:$0xf]
        %v642 = vld [vmem:[%s508 + $0xc] sm:$0xf]
        %v647 = vunpack.c.l.b16 %v639
        %v648 = vunpack.c.l.b16 %v640
        %v649 = vunpack.c.l.b16 %v641
        %v650 = vunpack.c.l.b16 %v642
        %v651 = vpack.c.b16 %v648, %v647
        %v652 = vpack.c.b16 %v650, %v649
        %v656 = vsel %vm536, %v519, 0
        %658 = vmatprep.subr.bf16.mxu0 0
        %659 = vmatpush1.bf16.msra.mxu0 %v651
        %660 = vmatprep.subr.bf16.mxu0 0
        %661 = vmatpush1.bf16.msra.mxu0 %v652
        %662 = vmatprep.subr.bf16.mxu0 0
        %663 = vmatpush1.bf16.msra.mxu0 0
        %664 = vmatprep.subr.bf16.mxu0 0
        %665 = vmatpush1.bf16.msra.mxu0 0
        %666 = vmatprep.subr.bf16.mxu0 0
        %667 = vmatpush1.bf16.msra.mxu0 0
        %668 = vmatprep.subr.bf16.mxu0 0
        %669 = vmatpush1.bf16.msra.mxu0 0
        %670 = vmatprep.subr.bf16.mxu0 0
        %671 = vmatpush1.bf16.msra.mxu0 0
        %672 = vmatprep.subr.bf16.mxu0 0
        %673 = vmatpush1.bf16.msra.mxu0 0
        %674 = vmatprep.subr.bf16.mxu0 0
        %675 = vmatpush1.bf16.msra.mxu0 0
        %676 = vmatprep.subr.bf16.mxu0 0
        %677 = vmatpush1.bf16.msra.mxu0 0
        %678 = vmatprep.subr.bf16.mxu0 0
        %679 = vmatpush1.bf16.msra.mxu0 0
        %680 = vmatprep.subr.bf16.mxu0 0
        %681 = vmatpush1.bf16.msra.mxu0 0
        %682 = vmatprep.subr.bf16.mxu0 0
        %683 = vmatpush1.bf16.msra.mxu0 0
        %684 = vmatprep.subr.bf16.mxu0 0
        %685 = vmatpush1.bf16.msra.mxu0 0
        %686 = vmatprep.subr.bf16.mxu0 0
        %687 = vmatpush1.bf16.msra.mxu0 0
        %688 = vmatprep.subr.bf16.mxu0 0
        %689 = vmatpush1.bf16.msra.mxu0 0
        %690 = vmatprep.mubr.bf16.mxu0 0
        %691 = vmatmul.mubr.bf16.gmra.mrb[0].mxu0 %v656
        %v692 = vpop.f32.mrb[0].mxu0
        %v693 = vadd.f32 0.0, %v692
        %v694 = vpop.f32.mrb[0].mxu0
        %v695 = vpop.f32.mrb[0].mxu0
        %v696 = vpop.f32.mrb[0].mxu0
        %697 = vdwg.mxu0
        %v698 = vpack.c.bf16 %v575, %v575
        %v699 = vpack.c.bf16 %v634, %v634
        %vm700 = vcmask 64512
        %v702 = vsel %vm700, %v698, 0
        %v705 = vsel %vm700, %v699, 0
        %707 = vmatprep.subr.bf16.mxu0 0
        %708 = vmatpush1.bf16.xpose.msra.mxu0 %v705
        %709 = vmatprep.subr.bf16.mxu0 0
        %710 = vmatpush1.bf16.xpose.msra.mxu0 0
        %711 = vmatprep.subr.bf16.mxu0 0
        %712 = vmatpush1.bf16.xpose.msra.mxu0 0
        %713 = vmatprep.subr.bf16.mxu0 0
        %714 = vmatpush1.bf16.xpose.msra.mxu0 0
        %715 = vmatprep.subr.bf16.mxu0 0
        %716 = vmatpush1.bf16.xpose.msra.mxu0 0
        %717 = vmatprep.subr.bf16.mxu0 0
        %718 = vmatpush1.bf16.xpose.msra.mxu0 0
        %719 = vmatprep.subr.bf16.mxu0 0
        %720 = vmatpush1.bf16.xpose.msra.mxu0 0
        %721 = vmatprep.subr.bf16.mxu0 0
        %722 = vmatpush1.bf16.xpose.msra.mxu0 0
        %723 = vmatprep.subr.bf16.mxu0 0
        %724 = vmatpush1.bf16.xpose.msra.mxu0 0
        %725 = vmatprep.subr.bf16.mxu0 0
        %726 = vmatpush1.bf16.xpose.msra.mxu0 0
        %727 = vmatprep.subr.bf16.mxu0 0
        %728 = vmatpush1.bf16.xpose.msra.mxu0 0
        %729 = vmatprep.subr.bf16.mxu0 0
        %730 = vmatpush1.bf16.xpose.msra.mxu0 0
        %731 = vmatprep.subr.bf16.mxu0 0
        %732 = vmatpush1.bf16.xpose.msra.mxu0 0
        %733 = vmatprep.subr.bf16.mxu0 0
        %734 = vmatpush1.bf16.xpose.msra.mxu0 0
        %735 = vmatprep.subr.bf16.mxu0 0
        %736 = vmatpush1.bf16.xpose.msra.mxu0 0
        %737 = vmatprep.subr.bf16.mxu0 0
        %738 = vmatpush1.bf16.xpose.msra.mxu0 0
        %739 = vmatprep.mubr.bf16.mxu0 0
        %740 = vmatmul.mubr.bf16.gmra.mrb[0].mxu0 %v702
        %v741 = vpop.f32.mrb[0].mxu0
        %v742 = vadd.f32 0.0, %v741
        %v743 = vpop.f32.mrb[0].mxu0
        %v744 = vpop.f32.mrb[0].mxu0
        %v745 = vpop.f32.mrb[0].mxu0
        %746 = vdwg.mxu0
        %v747 = vsel %vm700, %v742, -inf
        %748 = vmax.xlane.f32.xlu0 %v747
        %v749 = vpop.xlane.xlu0 %748
        %v750 = vsub.f32 %v742, %v749
        %v751 = vmul.f32 %v750, 1.442695
        %v752 = vpow.pop %v751
        %v753 = vsel %vm700, %v752, 0.0
        %754 = vadd.xlane.f32.xlu0 %v753
        %v755 = vpop.xlane.xlu0 %754
        %v756 = vrcp.pop %v755
        %v757 = vmul.f32 %v752, %v756
        %758 = vst.msk [vmem:[%s478] sm:$0xff] %vm700, %v757
        %v759 = vpack.c.bf16 %v757, %v757
        %v760 = vpack.c.bf16 %v693, %v693
        %v762 = vsel %vm700, %v759, 0
        %vm764 = vcmask 1043456
        %v766 = vsel %vm764, %v760, 0
        %768 = vmatprep.subr.bf16.mxu0 0
        %769 = vmatpush1.bf16.msra.mxu0 %v766
        %770 = vmatprep.subr.bf16.mxu0 0
        %771 = vmatpush1.bf16.msra.mxu0 0
        %772 = vmatprep.subr.bf16.mxu0 0
        %773 = vmatpush1.bf16.msra.mxu0 0
        %774 = vmatprep.subr.bf16.mxu0 0
        %775 = vmatpush1.bf16.msra.mxu0 0
        %776 = vmatprep.subr.bf16.mxu0 0
        %777 = vmatpush1.bf16.msra.mxu0 0
        %778 = vmatprep.subr.bf16.mxu0 0
        %779 = vmatpush1.bf16.msra.mxu0 0
        %780 = vmatprep.subr.bf16.mxu0 0
        %781 = vmatpush1.bf16.msra.mxu0 0
        %782 = vmatprep.subr.bf16.mxu0 0
        %783 = vmatpush1.bf16.msra.mxu0 0
        %784 = vmatprep.subr.bf16.mxu0 0
        %785 = vmatpush1.bf16.msra.mxu0 0
        %786 = vmatprep.subr.bf16.mxu0 0
        %787 = vmatpush1.bf16.msra.mxu0 0
        %788 = vmatprep.subr.bf16.mxu0 0
        %789 = vmatpush1.bf16.msra.mxu0 0
        %790 = vmatprep.subr.bf16.mxu0 0
        %791 = vmatpush1.bf16.msra.mxu0 0
        %792 = vmatprep.subr.bf16.mxu0 0
        %793 = vmatpush1.bf16.msra.mxu0 0
        %794 = vmatprep.subr.bf16.mxu0 0
        %795 = vmatpush1.bf16.msra.mxu0 0
        %796 = vmatprep.subr.bf16.mxu0 0
        %797 = vmatpush1.bf16.msra.mxu0 0
        %798 = vmatprep.subr.bf16.mxu0 0
        %799 = vmatpush1.bf16.msra.mxu0 0
        %800 = vmatprep.mubr.bf16.mxu0 0
        %801 = vmatmul.mubr.bf16.gmra.mrb[0].mxu0 %v762
        %v802 = vpop.f32.mrb[0].mxu0
        %v803 = vadd.f32 0.0, %v802
        %v804 = vpop.f32.mrb[0].mxu0
        %v805 = vpop.f32.mrb[0].mxu0
        %v806 = vpop.f32.mrb[0].mxu0
        %807 = vdwg.mxu0
        %v808 = vpack.c.bf16 %v803, %v803
        %v809 = vld [vmem:[%s512] sm:$0xf]
        %v811 = vsel %vm700, %v808, 0
        %v814 = vsel %vm764, %v809, 0
        %816 = vmatprep.subr.bf16.mxu0 0
        %817 = vmatpush1.bf16.msra.mxu0 %v814
        %818 = vmatprep.subr.bf16.mxu0 0
        %819 = vmatpush1.bf16.msra.mxu0 0
        %820 = vmatprep.subr.bf16.mxu0 0
        %821 = vmatpush1.bf16.msra.mxu0 0
        %822 = vmatprep.subr.bf16.mxu0 0
        %823 = vmatpush1.bf16.msra.mxu0 0
        %824 = vmatprep.subr.bf16.mxu0 0
        %825 = vmatpush1.bf16.msra.mxu0 0
        %826 = vmatprep.subr.bf16.mxu0 0
        %827 = vmatpush1.bf16.msra.mxu0 0
        %828 = vmatprep.subr.bf16.mxu0 0
        %829 = vmatpush1.bf16.msra.mxu0 0
        %830 = vmatprep.subr.bf16.mxu0 0
        %831 = vmatpush1.bf16.msra.mxu0 0
        %832 = vmatprep.subr.bf16.mxu0 0
        %833 = vmatpush1.bf16.msra.mxu0 0
        %834 = vmatprep.subr.bf16.mxu0 0
        %835 = vmatpush1.bf16.msra.mxu0 0
        %836 = vmatprep.subr.bf16.mxu0 0
        %837 = vmatpush1.bf16.msra.mxu0 0
        %838 = vmatprep.subr.bf16.mxu0 0
        %839 = vmatpush1.bf16.msra.mxu0 0
        %840 = vmatprep.subr.bf16.mxu0 0
        %841 = vmatpush1.bf16.msra.mxu0 0
        %842 = vmatprep.subr.bf16.mxu0 0
        %843 = vmatpush1.bf16.msra.mxu0 0
        %844 = vmatprep.subr.bf16.mxu0 0
        %845 = vmatpush1.bf16.msra.mxu0 0
        %846 = vmatprep.subr.bf16.mxu0 0
        %847 = vmatpush1.bf16.msra.mxu0 0
        %848 = vmatprep.mubr.bf16.mxu0 0
        %849 = vmatmul.mubr.bf16.gmra.mrb[0].mxu0 %v811
        %v850 = vpop.f32.mrb[0].mxu0
        %v851 = vadd.f32 0.0, %v850
        %v852 = vpop.f32.mrb[0].mxu0
        %v853 = vpop.f32.mrb[0].mxu0
        %v854 = vpop.f32.mrb[0].mxu0
        %855 = vdwg.mxu0
        %p856 = scmp.eq.s32.totalorder %s35, 0
        // Predicated region
        $region57: #{tpu_custom_call.1} parent=55 // pred_check
          %p857 = pneg %p856
        $region58: #{tpu_custom_call.1} parent=55 // pred_check_branch
          %859 = sbr.rel (%p857) target = $region60
        $region59: #{tpu_custom_call.1} parent=55 // pred_region
          %860 = vst.msk [vmem:[#allocation2] sm:$0xff] %vm536, 0.0
        $region60: #{tpu_custom_call.1} parent=55 // pred_fallthru
          _
        %v861 = vld [vmem:[#allocation2] sm:$0xff]
        %v862 = vadd.f32 %v861, %v851
        %863 = vst.msk [vmem:[#allocation2] sm:$0xff] %vm536, %v862
        %p864 = scmp.eq.s32.totalorder %s35, 3
        // Predicated region
        $region61: #{tpu_custom_call.1} parent=55 // pred_check
          %p865 = pneg %p864
        $region62: #{tpu_custom_call.1} parent=55 // pred_check_branch
          %867 = sbr.rel (%p865) target = $region64
        $region63: #{tpu_custom_call.1} parent=55 // pred_region
          %v868 = vld [vmem:[#allocation2] sm:$0xff]
          %v869 = vadd.f32 %v868, %v514
          %v870 = vsel %vm536, %v869, 0.0
          %871 = vadd.xlane.f32.xlu0 %v870
          %v872 = vpop.xlane.xlu0 %871
          %v873 = vrcp.pop 32.0
          %v874 = vmul.f32 %v872, %v873
          %v875 = vsub.f32 %v869, %v874
          %v876 = vmul.f32 %v875, %v875
          %v877 = vsel %vm536, %v876, 0.0
          %878 = vadd.xlane.f32.xlu0 %v877
          %v879 = vpop.xlane.xlu0 %878
          %v880 = vmul.f32 %v879, %v873
          %v881 = vadd.f32 %v880, 1e-06
          %v882 = vrsqrt.pop %v881
          %v883 = vmul.f32 %v875, %v882
          %v884 = vld [vmem:[%s7] sm:$0x1]
          %v886 = vlaneseq
          %v887 = vshrl.u32 %v886, 7
          %v888 = vsub.s32 0, %v887
          %v889 = vrot.slane %v884, %v888
          %v891 = vmul.f32 %v883, %v889
          %v892 = vld [vmem:[%s8] sm:$0x1]
          %v894 = vlaneseq
          %v895 = vshrl.u32 %v894, 7
          %v896 = vsub.s32 0, %v895
          %v897 = vrot.slane %v892, %v896
          %v899 = vadd.f32 %v891, %v897
          %900 = vst.msk [vmem:[%s471] sm:$0xff] %vm536, %v899
        $region64: #{tpu_custom_call.1} parent=55 // pred_fallthru
          _
        %s901 = sand.u32 %s283, 1
        %s902 = scalar_lea.sflag [#allocation4], %s901
        %s903 = sand.u32 %s283, 1
        %s904 = smul.addr %s903, 8
        %s905 = scalar_lea.vmem [#allocation3], %s904
        %s906 = sand.u32 %s313, 1
        %s907 = scalar_lea.sflag [#allocation6], %s906
        %s908 = sand.u32 %s313, 1
        %s909 = smul.addr %s908, 8
        %s910 = scalar_lea.vmem [#allocation5], %s909
        // Predicated region
        $region65: #{tpu_custom_call.1} parent=55 // pred_check
          %p911 = pneg %p293
        $region66: #{tpu_custom_call.1} parent=55 // pred_check_branch
          %913 = sbr.rel (%p911) target = $region68
        $region67: #{tpu_custom_call.1} parent=55 // pred_region
          %s915 = ssub.s32 128, 128
          %916 = vsyncadd %s902, %s915
          %s917 = sadd.s32 %s34, %s33
          %s918 = smul.addr %s917, 128
          %s919 = scalar_lea.hbm %s9, %s918
          %s921 = sshll.u32 %s905, 4
          %s922 = int_to_ptr.vmem [resolvable:$true] %s921
          %924 = dma.vmem_to_hbm [thread:$0]  %s922, 128, %s919, %s902
        $region68: #{tpu_custom_call.1} parent=55 // pred_fallthru
          _
        // Predicated region
        $region69: #{tpu_custom_call.1} parent=55 // pred_check
          %p925 = pneg %p323
        $region70: #{tpu_custom_call.1} parent=55 // pred_check_branch
          %927 = sbr.rel (%p925) target = $region72
        $region71: #{tpu_custom_call.1} parent=55 // pred_region
          %s929 = ssub.s32 128, 128
          %930 = vsyncadd %s907, %s929
          %s931 = sadd.s32 %s34, %s35
          %s932 = smul.addr %s33, 4
          %s933 = sadd.s32 %s931, %s932
          %s934 = smul.addr %s933, 128
          %s935 = scalar_lea.hbm %s10, %s934
          %s937 = sshll.u32 %s910, 4
          %s938 = int_to_ptr.vmem [resolvable:$true] %s937
          %940 = dma.vmem_to_hbm [thread:$0]  %s938, 128, %s935, %s907
        $region72: #{tpu_custom_call.1} parent=55 // pred_fallthru
          _
      $region56: #{tpu_custom_call.1} parent=5 // pred_fallthru
        _
      %p941 = scmp.le.s32.totalorder 2, %s23
      // Predicated region
      $region73: #{tpu_custom_call.1} parent=5 // pred_check
        %p942 = pneg %p941
      $region74: #{tpu_custom_call.1} parent=5 // pred_check_branch
        %944 = sbr.rel (%p942) target = $region76
      $region75: #{tpu_custom_call.1} parent=5 // pred_region
        %s945 = ssub.s32 %s23, 2
        // Predicated region
        $region77: #{tpu_custom_call.1} parent=75 // pred_check
          %p946 = pneg %p299
        $region78: #{tpu_custom_call.1} parent=75 // pred_check_branch
          %948 = sbr.rel (%p946) target = $region80
        $region79: #{tpu_custom_call.1} parent=75 // pred_region
          %s949 = sand.u32 %s284, 1
          %s950 = scalar_lea.sflag [#allocation4], %s949
          %s951 = sand.u32 %s284, 1
          %s952 = smul.addr %s951, 8
          %s953 = scalar_lea.vmem [#allocation3], %s952
          %954 = dma.done %s950, 128
        $region80: #{tpu_custom_call.1} parent=75 // pred_fallthru
          _
        // Predicated region
        $region81: #{tpu_custom_call.1} parent=75 // pred_check
          %p955 = pneg %p329
        $region82: #{tpu_custom_call.1} parent=75 // pred_check_branch
          %957 = sbr.rel (%p955) target = $region84
        $region83: #{tpu_custom_call.1} parent=75 // pred_region
          %s958 = sand.u32 %s314, 1
          %s959 = scalar_lea.sflag [#allocation6], %s958
          %s960 = sand.u32 %s314, 1
          %s961 = smul.addr %s960, 8
          %s962 = scalar_lea.vmem [#allocation5], %s961
          %963 = dma.done %s959, 128
        $region84: #{tpu_custom_call.1} parent=75 // pred_fallthru
          _
      $region76: #{tpu_custom_call.1} parent=5 // pred_fallthru
        _
    $region6: #{tpu_custom_call.1} parent=1 // loop_footer
      %s27 = sadd.s32 1, %s23
    $region7: #{tpu_custom_call.1} parent=1 // loop_footer_branch
      %22 = sbr.rel target = $region3
    $region8: #{tpu_custom_call.1} parent=1 // loop_exit
      _
    %964 = vsyncpa [#allocation4], 1
    %s965 = scalar_lea.sflag [#allocation4], 1
    %966 = vsyncpa %s965, 1
    %967 = vsyncpa [#allocation6], 1
    %s968 = scalar_lea.sflag [#allocation6], 1
    %969 = vsyncpa %s968, 1

</llo_original>
